<compile_context>
chip_gen: v7x
topology: tpu7x:2x2x1
jax: 0.10.0
libtpu: 0.0.40
codegen_flags: <defaults>
</compile_context>

<pallas_src>
import math

import jax
import jax.numpy as jnp
from jax.experimental import pallas as pl
from jax.experimental.pallas import tpu as pltpu

LANE = 128
SUBLANE = 8
TARGET_BLOCK_BYTES = 4 << 20          # ~4 MiB blocks for the tiled VMEM path.
VMEM_LIMIT_BYTES = 32 << 20           # explicit (v5e scoped default is 16 MiB).
DMA_GRID_SHARDS = 2                   # v7x: shard DMA issue across both TCs.
DMA_CHUNKS_PER_STEP = 4               # in-flight DMAs per grid step.


# ---------------------------------------------------------------------------
# Shape resolution (torch.Tensor.view semantics, supports int / tuple, one -1)
# ---------------------------------------------------------------------------
def _resolve_view_shape(spec, total):
    dims = (spec,) if isinstance(spec, int) else tuple(int(d) for d in spec)
    if dims.count(-1) > 1:
        raise ValueError("view(): only one dimension may be -1")
    if -1 in dims:
        known = math.prod(d for d in dims if d != -1)
        if known == 0 or total % known != 0:
            raise ValueError(f"view(): cannot reshape {total} elements into {spec}")
        dims = tuple(total // known if d == -1 else d for d in dims)
    if math.prod(dims) != total:
        raise ValueError(f"view(): shape {dims} incompatible with {total} elements")
    return dims


# ---------------------------------------------------------------------------
# Explicit-copy path #1a: single whole-array HBM->HBM DMA (any size fallback)
# ---------------------------------------------------------------------------
def _dma_single_kernel(src_ref, dst_ref, sem):
    cp = pltpu.make_async_copy(src_ref, dst_ref, sem)
    cp.start()
    cp.wait()


def _copy_via_single_dma(flat):
    total = flat.size
    return pl.pallas_call(
        _dma_single_kernel,
        out_shape=jax.ShapeDtypeStruct(flat.shape, flat.dtype),
        in_specs=[pl.BlockSpec(memory_space=pl.ANY)],
        out_specs=pl.BlockSpec(memory_space=pl.ANY),
        scratch_shapes=[pltpu.SemaphoreType.DMA(())],
        cost_estimate=pl.CostEstimate(
            flops=0,
            transcendentals=0,
            bytes_accessed=2 * total * flat.dtype.itemsize,
        ),
    )(flat)


# ---------------------------------------------------------------------------
# Explicit-copy path #1b: chunked HBM->HBM DMAs (multiple in flight), grid
# sharded across TensorCores (v7x) via "parallel" dimension semantics.
# ---------------------------------------------------------------------------
def _copy_via_dma(flat):
    total = flat.size
    itemsize = flat.dtype.itemsize

    # The chunked path slices rows of a (rows, 128) slab; odd / tiny sizes use
    # the single-DMA fallback (still correct, no padding).
    if total % LANE != 0 or total < LANE * SUBLANE * 2:
        return _copy_via_single_dma(flat)

    rows = total // LANE
    slab = jnp.reshape(flat, (rows, LANE))        # metadata only

    grid_shards = DMA_GRID_SHARDS if rows % DMA_GRID_SHARDS == 0 else 1
    rows_per_step = rows // grid_shards
    chunks = max(1, min(DMA_CHUNKS_PER_STEP, rows_per_step // SUBLANE))
    chunk_rows = rows_per_step // chunks
    # Static per-step chunk sizes; last chunk absorbs the remainder.
    sizes = [chunk_rows] * chunks
    sizes[-1] += rows_per_step - chunk_rows * chunks

    def kernel(src_ref, dst_ref, sems):
        base = pl.program_id(0) * rows_per_step
        copies = []
        off = 0
        # Start all chunk DMAs back-to-back (multiple in flight), then wait.
        for j, sz in enumerate(sizes):
            cp = pltpu.make_async_copy(
                src_ref.at[pl.ds(base + off, sz), :],
                dst_ref.at[pl.ds(base + off, sz), :],
                sems.at[j],
            )
            cp.start()
            copies.append(cp)
            off += sz
        for cp in copies:
            cp.wait()

    out2d = pl.pallas_call(
        kernel,
        out_shape=jax.ShapeDtypeStruct((rows, LANE), flat.dtype),
        grid_spec=pltpu.PrefetchScalarGridSpec(
            num_scalar_prefetch=0,
            grid=(grid_shards,),
            in_specs=[pl.BlockSpec(memory_space=pl.ANY)],
            out_specs=pl.BlockSpec(memory_space=pl.ANY),
            scratch_shapes=[pltpu.SemaphoreType.DMA((chunks,))],
        ),
        compiler_params=pltpu.CompilerParams(
            dimension_semantics=("parallel",),     # v7x: both TCs issue DMAs
        ),
        cost_estimate=pl.CostEstimate(
            flops=0,
            transcendentals=0,
            bytes_accessed=2 * total * itemsize,
        ),
    )(slab)
    return jnp.reshape(out2d, (total,))            # metadata only


# ---------------------------------------------------------------------------
# Explicit-copy path #2: tiled VMEM copy with large lane-dense blocks
# ---------------------------------------------------------------------------
def _tiled_copy_kernel(x_ref, o_ref):
    o_ref[...] = x_ref[...]


def _copy_via_vmem_tiles(flat, *, block_bytes=TARGET_BLOCK_BYTES):
    total = flat.size
    itemsize = flat.dtype.itemsize
    assert total % LANE == 0, "vmem tiled path requires total % 128 == 0"

    # Prefer a wider lane-dense last dim (longer contiguous rows per DMA
    # descriptor / fully unmasked stores); fall back to 128.
    width = LANE
    for w in (1024, 512, 256):
        if total % w == 0 and total // w >= SUBLANE:
            width = w
            break
    rows = total // width

    # ~block_bytes per block, rows a multiple of 8 (satisfies the (8,128)
    # rule); a single full-extent block when the whole array fits in one tile.
    block_rows = max(SUBLANE,
                     (block_bytes // (width * itemsize)) // SUBLANE * SUBLANE)
    if rows <= block_rows:
        block_rows = rows                          # full array dims: always legal

    slab = jnp.reshape(flat, (rows, width))        # metadata only
    grid = (pl.cdiv(rows, block_rows),)

    out2d = pl.pallas_call(
        _tiled_copy_kernel,
        out_shape=jax.ShapeDtypeStruct((rows, width), flat.dtype),
        grid_spec=pltpu.PrefetchScalarGridSpec(
            num_scalar_prefetch=0,
            grid=grid,
            in_specs=[pl.BlockSpec((block_rows, width), lambda i: (i, 0))],
            out_specs=pl.BlockSpec((block_rows, width), lambda i: (i, 0)),
        ),
        compiler_params=pltpu.CompilerParams(
            dimension_semantics=("parallel",),       # v7x: 2 TCs share the rows
            vmem_limit_bytes=VMEM_LIMIT_BYTES,       # safe on v5e's 16 MiB default
        ),
        # NOTE: no input_output_aliases — force_copy returns an independent
        # buffer and avoids XLA's defensive pre-copy of a non-donated input.
        cost_estimate=pl.CostEstimate(
            flops=0,
            transcendentals=0,
            bytes_accessed=2 * total * itemsize,
        ),
    )(slab)
    return jnp.reshape(out2d, (total,))            # metadata only


# ---------------------------------------------------------------------------
# Public API
# ---------------------------------------------------------------------------
def view_pallas(x, shape, *, force_copy=False, method="dma"):
    """torch.Tensor.view(shape) semantics.

    Default: metadata-only jnp.reshape (the correct, zero-cost lowering of a
    contiguous view).  With force_copy=True the elements are explicitly
    materialized by a Pallas kernel; "dma" (chunked HBM->HBM copy) is the
    preferred method, "vmem" is a tiled VMEM-staged fallback.
    """
    out_shape = _resolve_view_shape(shape, x.size)
    if not force_copy:
        return jnp.reshape(x, out_shape)

    flat = jnp.reshape(x, (-1,))                   # metadata only
    if method == "vmem" and x.size % LANE == 0:
        flat_out = _copy_via_vmem_tiles(flat)
    else:
        flat_out = _copy_via_dma(flat)             # any size/dtype, no padding
    return jnp.reshape(flat_out, out_shape)


class View:
    """JAX/Pallas equivalent of the PyTorch View module."""

    def __init__(self, shape, *, force_copy=False, method="dma"):
        self.shape = (shape,)
        self.force_copy = force_copy
        self.method = method

    def __call__(self, x):
        return view_pallas(x, self.shape[0],
                           force_copy=self.force_copy, method=self.method)


if __name__ == "__main__":
    key = jax.random.PRNGKey(0)
    kx, ky, kz = jax.random.split(key, 3)

    # Small NCHW input consistent with the module's usage.
    x = jax.random.normal(kx, (2, 4, 16, 16), dtype=jnp.float32)
    ref = jnp.reshape(x, (-1,))

    # 1) Module forward: metadata-only view (no kernel, no copy) — torch .view.
    out = jax.block_until_ready(View(-1)(x))
    assert out.shape == ref.shape and out.dtype == ref.dtype
    assert bool(jnp.all(out == ref))

    # 2) Explicit-copy path #1b: chunked multi-DMA copy (small input).
    out_dma = jax.block_until_ready(View(-1, force_copy=True, method="dma")(x))
    assert out_dma.shape == ref.shape and out_dma.dtype == ref.dtype
    assert bool(jnp.all(out_dma == ref))

    # 3) Chunked DMA path on the spec's own (3, 3, 256, 256) shape:
    #    grid=(2,) "parallel", 4 in-flight chunk DMAs per grid step.
    y = jax.random.normal(ky, (3, 3, 256, 256), dtype=jnp.float32)
    ref_y = jnp.reshape(y, (-1,))
    out_dma_y = jax.block_until_ready(View(-1, force_copy=True, method="dma")(y))
    assert out_dma_y.shape == ref_y.shape and out_dma_y.dtype == ref_y.dtype
    assert bool(jnp.all(out_dma_y == ref_y))

    # 4) Explicit-copy path #1a: odd-sized input exercises the single-DMA
    #    fallback (no 128-divisibility, no padding/trimming).
    z = jax.random.normal(kz, (7, 11, 13), dtype=jnp.float32)
    ref_z = jnp.reshape(z, (-1,))
    out_z = jax.block_until_ready(View(-1, force_copy=True, method="dma")(z))
    assert out_z.shape == ref_z.shape and bool(jnp.all(out_z == ref_z))

    # 5) Explicit-copy path #2: tiled VMEM copy (single 4 MiB-class block).
    out_vmem = jax.block_until_ready(View(-1, force_copy=True, method="vmem")(y))
    assert out_vmem.shape == ref_y.shape and out_vmem.dtype == ref_y.dtype
    assert bool(jnp.all(out_vmem == ref_y))

    # 6) Tiled VMEM path with a reduced block size to exercise a multi-block
    #    grid including a partial (ragged) edge block.
    out_vmem_small = jax.block_until_ready(
        jnp.reshape(_copy_via_vmem_tiles(ref_y, block_bytes=320 * 1024),
                    ref_y.shape))
    assert bool(jnp.all(out_vmem_small == ref_y))

    print("KERNEL_OK")
</pallas_src>

<mosaic_0001>
module attributes {stable_mosaic.version = 11 : i64} {
  func.func @kernel(%arg0: i32, %arg1: memref<16x128xf32, #tpu.memory_space<any>>, %arg2: memref<16x128xf32, #tpu.memory_space<any>>, %arg3: memref<1x!tpu.dma_semaphore, #tpu.memory_space<semaphore_mem>>) attributes {dimension_semantics = [#tpu.dimension_semantics<parallel>], iteration_bounds = array<i64: 2>, scalar_prefetch = 0 : i64, scratch_operands = 1 : i64, tpu.core_type = #tpu.core_type<tc>, window_params = [{}, {}]} {
    %c8_i32 = arith.constant 8 : i32
    %0 = arith.muli %arg0, %c8_i32 : i32
    %c0_i32 = arith.constant 0 : i32
    %1 = arith.addi %0, %c0_i32 : i32
    %c0_i32_0 = arith.constant 0 : i32
    %2 = arith.addi %0, %c0_i32_0 : i32
    %c0_i32_1 = arith.constant 0 : i32
    %c0_i32_2 = arith.constant 0 : i32
    %3 = tpu.memref_slice %arg1[%1, %c0_i32_2] : memref<16x128xf32, #tpu.memory_space<any>> -> memref<8x128xf32, #tpu.memory_space<any>>
    %c0_i32_3 = arith.constant 0 : i32
    %4 = tpu.memref_slice %arg2[%2, %c0_i32_3] : memref<16x128xf32, #tpu.memory_space<any>> -> memref<8x128xf32, #tpu.memory_space<any>>
    %5 = tpu.memref_slice %arg3[%c0_i32_1] : memref<1x!tpu.dma_semaphore, #tpu.memory_space<semaphore_mem>> -> memref<1x!tpu.dma_semaphore, #tpu.memory_space<semaphore_mem>>
    %6 = tpu.memref_squeeze %5 : memref<1x!tpu.dma_semaphore, #tpu.memory_space<semaphore_mem>> -> memref<!tpu.dma_semaphore, #tpu.memory_space<semaphore_mem>>
    tpu.enqueue_dma source(%3 : memref<8x128xf32, #tpu.memory_space<any>>) target(%4 : memref<8x128xf32, #tpu.memory_space<any>>) target_semaphore(%6 : memref<!tpu.dma_semaphore, #tpu.memory_space<semaphore_mem>>)
    %c0_i32_4 = arith.constant 0 : i32
    %c0_i32_5 = arith.constant 0 : i32
    %7 = tpu.memref_slice %arg1[%1, %c0_i32_5] : memref<16x128xf32, #tpu.memory_space<any>> -> memref<8x128xf32, #tpu.memory_space<any>>
    %c0_i32_6 = arith.constant 0 : i32
    %8 = tpu.memref_slice %arg2[%2, %c0_i32_6] : memref<16x128xf32, #tpu.memory_space<any>> -> memref<8x128xf32, #tpu.memory_space<any>>
    %9 = tpu.memref_slice %arg3[%c0_i32_4] : memref<1x!tpu.dma_semaphore, #tpu.memory_space<semaphore_mem>> -> memref<1x!tpu.dma_semaphore, #tpu.memory_space<semaphore_mem>>
    %10 = tpu.memref_squeeze %9 : memref<1x!tpu.dma_semaphore, #tpu.memory_space<semaphore_mem>> -> memref<!tpu.dma_semaphore, #tpu.memory_space<semaphore_mem>>
    tpu.wait_dma2 semaphore(%10 : memref<!tpu.dma_semaphore, #tpu.memory_space<semaphore_mem>>) src(%7 : memref<8x128xf32, #tpu.memory_space<any>>) dst(%8 : memref<8x128xf32, #tpu.memory_space<any>>)
    return
  }
}

</mosaic_0001>

<llo_original>
// kernel: tpu_custom_call.1
$region0: #{tpu_custom_call.1}
  #allocation0 [shape = 'u32[]', space=smem, size = 0x4, offset = 0x4, fixed_abs, tag = 'smem constant byte address 0x4 - core index']
  #allocation1 [shape = 'u32[144,128]{1,0:T(1,128)}', space=vmem, size = 0x12000, scoped, tag = 'internal scratch']
  #allocation2 [shape = 's32[1]{0}', space=sflag, size = 0x4, scoped, tag = 'scratch operand']
  #allocation3 [shape = 's32[]', space=sflag, size = 0x4, offset = 0, fixed_abs, tag = 'sflag constant byte address 0x0 - dummy sync flag']
  #allocation4 [shape = 'u32[0]{0}', space=smem, size = 0, offset = 0, fixed_abs, tag = 'smem constant byte address 0x0 - null']
  %s0 = inlined_call_operand.hbm [shape: f32[16,128], index: 0, kind: input, shape index: {}]
  %s1 = inlined_call_operand.hbm [shape: f32[16,128], index: 1, kind: output, shape index: {}]
  %s2 = sld [smem:[#allocation0]]
  $region9: #{tpu_custom_call.1} parent=0
    _
  %s4 = ssub.s32 1, %s2
  %s5 = scalar_select 0, %s4, %s2
  loop: start=0, step=1, limit=2
  $region2: #{tpu_custom_call.1} parent=0 // loop_pre_header
    _
  $region3: #{tpu_custom_call.1} parent=0 // loop_header
    %s7 = sphi 0, %s11
    %p8 = scmp.ge.s32.totalorder %s7, 2
  $region4: #{tpu_custom_call.1} parent=0 // loop_header_branch
    %10 = sbr.rel (%p8) target = $region8
  $region5: #{tpu_custom_call.1} parent=0 // loop_body
    %s12 = sadd.s32 %s7, 1
    %s13 = smul.u32 %s7, 8
    %s14 = smul.addr %s13, 16
    %s15 = scalar_lea.hbm %s0, %s14
    %s16 = smul.addr %s13, 16
    %s17 = scalar_lea.hbm %s1, %s16
    %s19 = sshll.u32 1, 14
    %s20 = sxor.u32 4294967295, %s19
    %s23 = sshll.u32 3, 24
    %s24 = sxor.u32 4294967295, %s23
    %s25 = sand.u32 0, %s24
    %s27 = sor.u32 %s25, 0
    %30 = dma.general %s15, 128, %s17, [#allocation2], [#allocation3], [#allocation4], %s27, 0
    %s31 = smul.u32 8, 1
    %s32 = sshll.u32 %s31, 4
    %33 = dma.done [#allocation2], %s32
  $region6: #{tpu_custom_call.1} parent=0 // loop_footer
    %s11 = sadd.s32 1, %s7
  $region7: #{tpu_custom_call.1} parent=0 // loop_footer_branch
    %6 = sbr.rel target = $region3
  $region8: #{tpu_custom_call.1} parent=0 // loop_exit
    _
  %34 = vsyncmov [#allocation2]
  %s35 = vpop.sfrf %34
  %p36 = scmp.eq.s32.totalorder %s35, 0
  %p37 = pneg %p36
  %39 = shalt.err (%p37)

</llo_original>
